<compile_context>
chip_gen: v7x
topology: tpu7x:2x2x1
jax: 0.10.0
libtpu: 0.0.40
codegen_flags: <defaults>
</compile_context>

<pallas_src>
import functools

import jax
import jax.numpy as jnp
from jax import lax
from jax.experimental import pallas as pl
from jax.experimental.pallas import tpu as pltpu


# ---------------------------------------------------------------------------
# Sizing helpers
# ---------------------------------------------------------------------------
def _round_up(v, m):
    return ((v + m - 1) // m) * m


def _vmem_budget():
    """Generation-aware VMEM sizing.

    Returns (working_set_budget_bytes, vmem_limit_bytes).  v7x has 64 MiB of
    VMEM per TensorCore, v5e/v6e have 128 MiB; the small scoped default
    (16/32 MiB) is raised explicitly via CompilerParams(vmem_limit_bytes=...).
    """
    cap = 64 << 20                       # conservative fallback (v7x per-TC)
    try:
        info = pltpu.get_tpu_info()
        for attr in ("vmem_capacity_bytes", "vmem_bytes", "vmem_size_bytes"):
            v = getattr(info, attr, None)
            if v:
                cap = int(v)
                break
    except Exception:
        pass
    vmem_limit = min(int(cap * 0.70), 100 << 20)
    budget = min(int(cap * 0.50), 64 << 20)
    return budget, vmem_limit


def _choose_single_tf(n, f, budget):
    """Feature-tile width for the fused single-kernel path, or None if the
    full-batch (N, TF) block cannot fit double-buffered in the VMEM budget."""
    # Per-step working set (f32): 2 x-bufs + 2 y-bufs + ~2 tile-sized temps.
    bytes_per_col = 6 * n * 4
    if f <= 128:
        return f if bytes_per_col * f <= budget else None
    f_pad = _round_up(f, 128)
    tf = (budget // bytes_per_col) // 128 * 128
    if tf < 128:
        return None
    tf = min(tf, f_pad)
    # Keep >= 2 grid steps so the parallel feature axis can shard across both
    # TensorCores on v7x (harmless on v5e/v6e).
    tf = min(tf, _round_up(-(-f // 2), 128))
    return max(tf, 128)


def _choose_chunked_tiles(n, f, budget):
    """(TN, TF) for the two-pass (N-chunked) path."""
    if f <= 128:
        tf = f
    else:
        f_pad = _round_up(f, 128)
        tf = min(f_pad, 1024, _round_up(-(-f // 2), 128))
        tf = max(tf, 128)
    # Apply kernel is the larger working set: 2 x-bufs + 2 y-bufs + 1 temp.
    per_row = 5 * tf * 4
    tn = (budget // per_row) // 8 * 8
    tn = max(tn, 8)
    tn = min(tn, _round_up(n, 8))
    return tn, tf


# ---------------------------------------------------------------------------
# Kernels
# ---------------------------------------------------------------------------
def _make_fused_kernel(eps, momentum, n):
    """Single-kernel path: whole batch resident per feature tile."""
    eps = float(eps)
    momentum = float(momentum)
    inv_nm1 = 1.0 / float(max(n - 1, 1))   # unbiased divisor; N == 1 guarded

    def kernel(x_ref, gamma_ref, beta_ref, mavg_ref, mvar_ref,
               y_ref, new_mavg_ref, new_mvar_ref):
        x = x_ref[...].astype(jnp.float32)                     # (N, TF)

        mean = jnp.mean(x, axis=0, keepdims=True)              # (1, TF)
        diff = x - mean
        var = jnp.sum(diff * diff, axis=0, keepdims=True) * jnp.float32(inv_nm1)

        inv_std = lax.rsqrt(var + jnp.float32(eps))             # (1, TF)
        scale = inv_std * gamma_ref[...].astype(jnp.float32)    # (1, TF)

        # Reuse `diff`: y = (x - mean) * (gamma/std) + beta
        # (no separate shift temp, no third pass over the x tile).
        y_ref[...] = (diff * scale
                      + beta_ref[...].astype(jnp.float32)).astype(y_ref.dtype)

        m = jnp.float32(momentum)
        om = jnp.float32(1.0 - momentum)
        new_mavg_ref[...] = (mavg_ref[...].astype(jnp.float32) * m
                             + mean * om).astype(new_mavg_ref.dtype)
        new_mvar_ref[...] = (mvar_ref[...].astype(jnp.float32) * m
                             + var * om).astype(new_mvar_ref.dtype)

    return kernel


def _make_stats_kernel(n, tn):
    """Two-pass path, pass 1: per-feature sum and sum-of-squares over N chunks."""
    needs_mask = (n % tn) != 0

    def kernel(x_ref, sum_ref, sumsq_ref):
        nc = pl.program_id(1)

        @pl.when(nc == 0)
        def _():
            sum_ref[...] = jnp.zeros_like(sum_ref)
            sumsq_ref[...] = jnp.zeros_like(sumsq_ref)

        x = x_ref[...].astype(jnp.float32)                      # (TN, TF)
        if needs_mask:
            rows = lax.broadcasted_iota(jnp.int32, x.shape, 0) + nc * tn
            x = jnp.where(rows < n, x, jnp.float32(0.0))
        sum_ref[...] += jnp.sum(x, axis=0, keepdims=True)
        sumsq_ref[...] += jnp.sum(x * x, axis=0, keepdims=True)

    return kernel


def _apply_kernel(x_ref, scale_ref, shift_ref, y_ref):
    """Two-pass path, pass 2: y = x * scale + shift (per-feature affine)."""
    y_ref[...] = (x_ref[...].astype(jnp.float32) * scale_ref[...]
                  + shift_ref[...]).astype(y_ref.dtype)


# ---------------------------------------------------------------------------
# Wrapper
# ---------------------------------------------------------------------------
@functools.partial(jax.jit, static_argnames=("eps", "momentum", "force_two_pass",
                                             "tn_override", "tf_override"))
def batchnorm_forward(x, gamma, beta, moving_avg, moving_var,
                      eps=1e-5, momentum=0.1, force_two_pass=False,
                      tn_override=None, tf_override=None):
    """Training-mode BatchNorm forward.

    x:     (N, F) float32
    gamma, beta, moving_avg, moving_var: (F,) float32
    Returns (y, new_moving_avg, new_moving_var).
    """
    N, F = x.shape
    budget, vmem_limit = _vmem_budget()

    tf_single = None if force_two_pass else _choose_single_tf(N, F, budget)

    # ------------------------------------------------------------------
    # Path A: fused single kernel (full batch resident per feature tile)
    # ------------------------------------------------------------------
    if tf_single is not None:
        TF = tf_single
        gamma2 = gamma.reshape(1, F)
        beta2 = beta.reshape(1, F)
        mavg2 = moving_avg.reshape(1, F)
        mvar2 = moving_var.reshape(1, F)

        def row_spec():
            return pl.BlockSpec((1, TF), lambda j: (0, j))

        y, new_avg, new_var = pl.pallas_call(
            _make_fused_kernel(eps, momentum, N),
            out_shape=(
                jax.ShapeDtypeStruct((N, F), x.dtype),
                jax.ShapeDtypeStruct((1, F), moving_avg.dtype),
                jax.ShapeDtypeStruct((1, F), moving_var.dtype),
            ),
            grid_spec=pltpu.PrefetchScalarGridSpec(
                num_scalar_prefetch=0,
                grid=(pl.cdiv(F, TF),),
                in_specs=[
                    pl.BlockSpec((N, TF), lambda j: (0, j)),   # x
                    row_spec(),                                # gamma
                    row_spec(),                                # beta
                    row_spec(),                                # moving_avg
                    row_spec(),                                # moving_var
                ],
                out_specs=[
                    pl.BlockSpec((N, TF), lambda j: (0, j)),   # y
                    row_spec(),                                # new moving_avg
                    row_spec(),                                # new moving_var
                ],
            ),
            # moving stats update in place (inputs 3,4 alias outputs 1,2)
            input_output_aliases={3: 1, 4: 2},
            compiler_params=pltpu.CompilerParams(
                dimension_semantics=("parallel",),
                vmem_limit_bytes=vmem_limit),
        )(x, gamma2, beta2, mavg2, mvar2)

        return y, new_avg.reshape(F), new_var.reshape(F)

    # ------------------------------------------------------------------
    # Path B: large-N two-pass path (N-chunked stats kernel + apply kernel)
    # ------------------------------------------------------------------
    TN, TF = _choose_chunked_tiles(N, F, budget)
    if tn_override is not None:
        TN = int(tn_override)
    if tf_override is not None:
        TF = int(tf_override)

    f_tiles = pl.cdiv(F, TF)
    n_chunks = pl.cdiv(N, TN)

    ssum, ssq = pl.pallas_call(
        _make_stats_kernel(N, TN),
        out_shape=(
            jax.ShapeDtypeStruct((1, F), jnp.float32),
            jax.ShapeDtypeStruct((1, F), jnp.float32),
        ),
        grid_spec=pltpu.PrefetchScalarGridSpec(
            num_scalar_prefetch=0,
            grid=(f_tiles, n_chunks),
            in_specs=[pl.BlockSpec((TN, TF), lambda j, nc: (nc, j))],
            out_specs=[
                pl.BlockSpec((1, TF), lambda j, nc: (0, j)),
                pl.BlockSpec((1, TF), lambda j, nc: (0, j)),
            ],
        ),
        compiler_params=pltpu.CompilerParams(
            dimension_semantics=("parallel", "arbitrary"),
            vmem_limit_bytes=vmem_limit),
    )(x)

    s = ssum.reshape(F)
    sq = ssq.reshape(F)
    mean = s / jnp.float32(N)
    # Single-pass variance (f32 accumulation); clamp guards tiny negative
    # values from rounding.  Two-pass form is used in Path A.
    var = jnp.maximum(sq - jnp.float32(N) * mean * mean, 0.0) \
        / jnp.float32(max(N - 1, 1))
    inv_std = lax.rsqrt(var + jnp.float32(eps))
    scale = gamma.astype(jnp.float32) * inv_std
    shift = beta.astype(jnp.float32) - mean * scale
    new_avg = (moving_avg.astype(jnp.float32) * momentum
               + mean * (1.0 - momentum)).astype(moving_avg.dtype)
    new_var = (moving_var.astype(jnp.float32) * momentum
               + var * (1.0 - momentum)).astype(moving_var.dtype)

    y = pl.pallas_call(
        _apply_kernel,
        out_shape=jax.ShapeDtypeStruct((N, F), x.dtype),
        grid_spec=pltpu.PrefetchScalarGridSpec(
            num_scalar_prefetch=0,
            grid=(f_tiles, n_chunks),
            in_specs=[
                pl.BlockSpec((TN, TF), lambda j, nc: (nc, j)),   # x
                pl.BlockSpec((1, TF), lambda j, nc: (0, j)),     # scale
                pl.BlockSpec((1, TF), lambda j, nc: (0, j)),     # shift
            ],
            out_specs=pl.BlockSpec((TN, TF), lambda j, nc: (nc, j)),
        ),
        compiler_params=pltpu.CompilerParams(
            dimension_semantics=("parallel", "parallel"),
            vmem_limit_bytes=vmem_limit),
    )(x, scale.reshape(1, F), shift.reshape(1, F))

    return y, new_avg, new_var


# ---------------------------------------------------------------------------
# Reference + tests
# ---------------------------------------------------------------------------
def _reference(x, gamma, beta, moving_avg, moving_var, eps, momentum):
    N = x.shape[0]
    mean = jnp.mean(x, axis=0)
    var = jnp.sum((x - mean) ** 2, axis=0) / max(N - 1, 1)   # unbiased, like torch.var
    y = (x - mean) / jnp.sqrt(var + eps) * gamma + beta
    new_avg = moving_avg * momentum + mean * (1.0 - momentum)
    new_var = moving_var * momentum + var * (1.0 - momentum)
    return y, new_avg, new_var


if __name__ == "__main__":
    eps, momentum = 1e-5, 0.1

    # ---- Case 1: module-consistent small shape (batch=8, num_features=32) ----
    N, F = 8, 32
    x = jax.random.normal(jax.random.PRNGKey(0), (N, F), dtype=jnp.float32)
    gamma = jnp.ones((F,), dtype=jnp.float32)          # BatchNorm._reset()
    beta = jnp.zeros((F,), dtype=jnp.float32)
    mavg = jnp.zeros((F,), dtype=jnp.float32)
    mvar = jnp.ones((F,), dtype=jnp.float32)

    y, navg, nvar = batchnorm_forward(x, gamma, beta, mavg, mvar,
                                      eps=eps, momentum=momentum)
    jax.block_until_ready((y, navg, nvar))
    y_r, a_r, v_r = _reference(x, gamma, beta, mavg, mvar, eps, momentum)
    assert jnp.allclose(y, y_r, atol=1e-5, rtol=1e-5), "y mismatch (case 1)"
    assert jnp.allclose(navg, a_r, atol=1e-6, rtol=1e-6), "avg mismatch (case 1)"
    assert jnp.allclose(nvar, v_r, atol=1e-6, rtol=1e-6), "var mismatch (case 1)"

    # ---- Case 2: multi-tile feature path (fused kernel, grid > 1) ----
    N2, F2 = 16, 512
    k1, k2, k3 = jax.random.split(jax.random.PRNGKey(0), 3)
    x2 = jax.random.normal(k1, (N2, F2), dtype=jnp.float32)
    g2 = jax.random.normal(k2, (F2,), dtype=jnp.float32)
    b2 = jax.random.normal(k3, (F2,), dtype=jnp.float32)
    ma2 = jnp.zeros((F2,), dtype=jnp.float32)
    mv2 = jnp.ones((F2,), dtype=jnp.float32)

    y2, navg2, nvar2 = batchnorm_forward(x2, g2, b2, ma2, mv2,
                                         eps=eps, momentum=momentum)
    jax.block_until_ready((y2, navg2, nvar2))
    y2_r, a2_r, v2_r = _reference(x2, g2, b2, ma2, mv2, eps, momentum)
    assert jnp.allclose(y2, y2_r, atol=1e-4, rtol=1e-4), "y mismatch (case 2)"
    assert jnp.allclose(navg2, a2_r, atol=1e-5, rtol=1e-5), "avg mismatch (case 2)"
    assert jnp.allclose(nvar2, v2_r, atol=1e-5, rtol=1e-5), "var mismatch (case 2)"

    # ---- Case 3: exercise the large-N two-pass path (forced, ragged N & F) ----
    N3, F3 = 60, 200
    k4, k5, k6 = jax.random.split(jax.random.PRNGKey(0), 3)
    x3 = jax.random.normal(k4, (N3, F3), dtype=jnp.float32)
    g3 = jax.random.normal(k5, (F3,), dtype=jnp.float32)
    b3 = jax.random.normal(k6, (F3,), dtype=jnp.float32)
    ma3 = jnp.zeros((F3,), dtype=jnp.float32)
    mv3 = jnp.ones((F3,), dtype=jnp.float32)

    y3, navg3, nvar3 = batchnorm_forward(x3, g3, b3, ma3, mv3,
                                         eps=eps, momentum=momentum,
                                         force_two_pass=True,
                                         tn_override=16, tf_override=128)
    jax.block_until_ready((y3, navg3, nvar3))
    y3_r, a3_r, v3_r = _reference(x3, g3, b3, ma3, mv3, eps, momentum)
    assert jnp.allclose(y3, y3_r, atol=1e-4, rtol=1e-4), "y mismatch (case 3)"
    assert jnp.allclose(navg3, a3_r, atol=1e-5, rtol=1e-5), "avg mismatch (case 3)"
    assert jnp.allclose(nvar3, v3_r, atol=1e-4, rtol=1e-4), "var mismatch (case 3)"

    print("KERNEL_OK")
</pallas_src>

<mosaic_0001>
module attributes {stable_mosaic.version = 11 : i64} {
  func.func @kernel(%arg0: i32, %arg1: memref<8x32xf32, #tpu.memory_space<vmem>>, %arg2: memref<1x32xf32, #tpu.memory_space<vmem>>, %arg3: memref<1x32xf32, #tpu.memory_space<vmem>>, %arg4: memref<1x32xf32, #tpu.memory_space<vmem>>, %arg5: memref<1x32xf32, #tpu.memory_space<vmem>>, %arg6: memref<8x32xf32, #tpu.memory_space<vmem>>, %arg7: memref<1x32xf32, #tpu.memory_space<vmem>>, %arg8: memref<1x32xf32, #tpu.memory_space<vmem>>) attributes {dimension_semantics = [#tpu.dimension_semantics<parallel>], iteration_bounds = array<i64: 1>, scalar_prefetch = 0 : i64, scratch_operands = 0 : i64, tpu.core_type = #tpu.core_type<tc>, window_params = [{transform_indices = @transform_0, window_bounds = array<i64: 8, 32>}, {transform_indices = @transform_1, window_bounds = array<i64: 1, 32>}, {transform_indices = @transform_2, window_bounds = array<i64: 1, 32>}, {transform_indices = @transform_3, window_bounds = array<i64: 1, 32>}, {transform_indices = @transform_4, window_bounds = array<i64: 1, 32>}, {transform_indices = @transform_5, window_bounds = array<i64: 8, 32>}, {transform_indices = @transform_6, window_bounds = array<i64: 1, 32>}, {transform_indices = @transform_7, window_bounds = array<i64: 1, 32>}]} {
    %c0 = arith.constant 0 : index
    %c0_0 = arith.constant 0 : index
    %0 = vector.load %arg1[%c0, %c0_0] : memref<8x32xf32, #tpu.memory_space<vmem>>, vector<8x32xf32>
    %cst = arith.constant dense<0.000000e+00> : vector<32xf32>
    %1 = vector.multi_reduction <add>, %0, %cst [0] : vector<8x32xf32> to vector<32xf32>
    %2 = vector.shape_cast %1 : vector<32xf32> to vector<1x32xf32>
    %cst_1 = arith.constant 8.000000e+00 : f32
    %3 = vector.broadcast %cst_1 : f32 to vector<1x32xf32>
    %4 = arith.divf %2, %3 : vector<1x32xf32>
    %5 = vector.broadcast %4 : vector<1x32xf32> to vector<8x32xf32>
    %6 = arith.subf %0, %5 : vector<8x32xf32>
    %7 = arith.mulf %6, %6 : vector<8x32xf32>
    %cst_2 = arith.constant dense<0.000000e+00> : vector<32xf32>
    %8 = vector.multi_reduction <add>, %7, %cst_2 [0] : vector<8x32xf32> to vector<32xf32>
    %9 = vector.shape_cast %8 : vector<32xf32> to vector<1x32xf32>
    %cst_3 = arith.constant 0.142857149 : f32
    %10 = vector.broadcast %cst_3 : f32 to vector<1x32xf32>
    %11 = arith.mulf %9, %10 : vector<1x32xf32>
    %cst_4 = arith.constant 9.99999974E-6 : f32
    %12 = vector.broadcast %cst_4 : f32 to vector<1x32xf32>
    %13 = arith.addf %11, %12 : vector<1x32xf32>
    %14 = math.rsqrt %13 : vector<1x32xf32>
    %c0_5 = arith.constant 0 : index
    %c0_6 = arith.constant 0 : index
    %15 = vector.load %arg2[%c0_5, %c0_6] : memref<1x32xf32, #tpu.memory_space<vmem>>, vector<1x32xf32>
    %16 = arith.mulf %14, %15 : vector<1x32xf32>
    %17 = vector.broadcast %16 : vector<1x32xf32> to vector<8x32xf32>
    %18 = arith.mulf %6, %17 : vector<8x32xf32>
    %c0_7 = arith.constant 0 : index
    %c0_8 = arith.constant 0 : index
    %19 = vector.load %arg3[%c0_7, %c0_8] : memref<1x32xf32, #tpu.memory_space<vmem>>, vector<1x32xf32>
    %20 = vector.broadcast %19 : vector<1x32xf32> to vector<8x32xf32>
    %21 = arith.addf %18, %20 : vector<8x32xf32>
    %c0_9 = arith.constant 0 : index
    %c0_10 = arith.constant 0 : index
    %22 = vector.load %arg6[%c0_9, %c0_10] : memref<8x32xf32, #tpu.memory_space<vmem>>, vector<8x32xf32>
    tpu.vector_store %arg6[%c0_9, %c0_10], %21 {strides = array<i32>} : memref<8x32xf32, #tpu.memory_space<vmem>>, vector<8x32xf32>,
    %c0_11 = arith.constant 0 : index
    %c0_12 = arith.constant 0 : index
    %23 = vector.load %arg4[%c0_11, %c0_12] : memref<1x32xf32, #tpu.memory_space<vmem>>, vector<1x32xf32>
    %cst_13 = arith.constant 1.000000e-01 : f32
    %24 = vector.broadcast %cst_13 : f32 to vector<1x32xf32>
    %25 = arith.mulf %23, %24 : vector<1x32xf32>
    %cst_14 = arith.constant 0.899999976 : f32
    %26 = vector.broadcast %cst_14 : f32 to vector<1x32xf32>
    %27 = arith.mulf %4, %26 : vector<1x32xf32>
    %28 = arith.addf %25, %27 : vector<1x32xf32>
    %c0_15 = arith.constant 0 : index
    %c0_16 = arith.constant 0 : index
    %29 = vector.load %arg7[%c0_15, %c0_16] : memref<1x32xf32, #tpu.memory_space<vmem>>, vector<1x32xf32>
    tpu.vector_store %arg7[%c0_15, %c0_16], %28 {strides = array<i32>} : memref<1x32xf32, #tpu.memory_space<vmem>>, vector<1x32xf32>,
    %c0_17 = arith.constant 0 : index
    %c0_18 = arith.constant 0 : index
    %30 = vector.load %arg5[%c0_17, %c0_18] : memref<1x32xf32, #tpu.memory_space<vmem>>, vector<1x32xf32>
    %cst_19 = arith.constant 1.000000e-01 : f32
    %31 = vector.broadcast %cst_19 : f32 to vector<1x32xf32>
    %32 = arith.mulf %30, %31 : vector<1x32xf32>
    %cst_20 = arith.constant 0.899999976 : f32
    %33 = vector.broadcast %cst_20 : f32 to vector<1x32xf32>
    %34 = arith.mulf %11, %33 : vector<1x32xf32>
    %35 = arith.addf %32, %34 : vector<1x32xf32>
    %c0_21 = arith.constant 0 : index
    %c0_22 = arith.constant 0 : index
    %36 = vector.load %arg8[%c0_21, %c0_22] : memref<1x32xf32, #tpu.memory_space<vmem>>, vector<1x32xf32>
    tpu.vector_store %arg8[%c0_21, %c0_22], %35 {strides = array<i32>} : memref<1x32xf32, #tpu.memory_space<vmem>>, vector<1x32xf32>,
    return
  }
  func.func @transform_0(%arg0: i32) -> (i32, i32) {
    %c0_i32 = arith.constant 0 : i32
    %c0_i32_0 = arith.constant 0 : i32
    return %c0_i32, %arg0 : i32, i32
  }
  func.func @transform_1(%arg0: i32) -> (i32, i32) {
    %c0_i32 = arith.constant 0 : i32
    %c0_i32_0 = arith.constant 0 : i32
    return %c0_i32, %arg0 : i32, i32
  }
  func.func @transform_2(%arg0: i32) -> (i32, i32) {
    %c0_i32 = arith.constant 0 : i32
    %c0_i32_0 = arith.constant 0 : i32
    return %c0_i32, %arg0 : i32, i32
  }
  func.func @transform_3(%arg0: i32) -> (i32, i32) {
    %c0_i32 = arith.constant 0 : i32
    %c0_i32_0 = arith.constant 0 : i32
    return %c0_i32, %arg0 : i32, i32
  }
  func.func @transform_4(%arg0: i32) -> (i32, i32) {
    %c0_i32 = arith.constant 0 : i32
    %c0_i32_0 = arith.constant 0 : i32
    return %c0_i32, %arg0 : i32, i32
  }
  func.func @transform_5(%arg0: i32) -> (i32, i32) {
    %c0_i32 = arith.constant 0 : i32
    %c0_i32_0 = arith.constant 0 : i32
    return %c0_i32, %arg0 : i32, i32
  }
  func.func @transform_6(%arg0: i32) -> (i32, i32) {
    %c0_i32 = arith.constant 0 : i32
    %c0_i32_0 = arith.constant 0 : i32
    return %c0_i32, %arg0 : i32, i32
  }
  func.func @transform_7(%arg0: i32) -> (i32, i32) {
    %c0_i32 = arith.constant 0 : i32
    %c0_i32_0 = arith.constant 0 : i32
    return %c0_i32, %arg0 : i32, i32
  }
}

</mosaic_0001>

<llo_original>
// kernel: batchnorm_forward.1
$region0: #{batchnorm_forward.1}
  #allocation0 [shape = 'u32[]', space=smem, size = 0x4, offset = 0x4, fixed_abs, tag = 'smem constant byte address 0x4 - core index']
  #allocation1 [shape = 'u32[144,128]{1,0:T(1,128)}', space=vmem, size = 0x12000, scoped, tag = 'internal scratch']
  %s0 = inlined_call_operand.vmem [shape: f32[8,32], index: 0, kind: input, shape index: {}]
  %s1 = inlined_call_operand.vmem [shape: f32[1,32], index: 1, kind: input, shape index: {}]
  %s2 = inlined_call_operand.vmem [shape: f32[1,32], index: 2, kind: input, shape index: {}]
  %s3 = inlined_call_operand.vmem [shape: f32[1,32], index: 3, kind: input, shape index: {}, may-alias: {3,6}]
  %s4 = inlined_call_operand.vmem [shape: f32[1,32], index: 4, kind: input, shape index: {}, may-alias: {4,7}]
  %s5 = inlined_call_operand.hbm [shape: f32[8,32], index: 5, kind: output, shape index: {0}]
  %s6 = inlined_call_operand.vmem [shape: f32[1,32], index: 6, kind: output, shape index: {1}, may-alias: {3,6}]
  %s7 = inlined_call_operand.vmem [shape: f32[1,32], index: 7, kind: output, shape index: {2}, may-alias: {4,7}]
  %8 = xla_tuple %s5, %s6, %s7
  %s9 = sld [smem:[#allocation0]]
  $region46: #{batchnorm_forward.1} parent=0
    _
  %s11 = ssub.s32 1, %s9
  %s12 = scalar_select 0, %s11, %s9
  $region1: #{batchnorm_forward.1} parent=0
    #allocation2 [shape = 'u8[4096]{0}', space=vmem, size = 0x1000, scoped, tag = 'output window, operand 0, single buffered']
    #allocation3 [shape = 's32[1]{0}', space=sflag, size = 0x4, scoped, tag = 'scoped memory for batchnorm_forward.1']
    %13 = vsyncpa [#allocation3], 0
    // Predicated region
    $region2: #{batchnorm_forward.1} parent=1 // pred_check
      _
    $region3: #{batchnorm_forward.1} parent=1 // pred_check_branch
      %15 = sbr.rel (0) target = $region5
    $region4: #{batchnorm_forward.1} parent=1 // pred_region
      _
    $region5: #{batchnorm_forward.1} parent=1 // pred_fallthru
      _
    // Predicated region
    $region6: #{batchnorm_forward.1} parent=1 // pred_check
      _
    $region7: #{batchnorm_forward.1} parent=1 // pred_check_branch
      %17 = sbr.rel (0) target = $region9
    $region8: #{batchnorm_forward.1} parent=1 // pred_region
      _
    $region9: #{batchnorm_forward.1} parent=1 // pred_fallthru
      _
    // Predicated region
    $region10: #{batchnorm_forward.1} parent=1 // pred_check
      _
    $region11: #{batchnorm_forward.1} parent=1 // pred_check_branch
      %19 = sbr.rel (0) target = $region13
    $region12: #{batchnorm_forward.1} parent=1 // pred_region
      _
    $region13: #{batchnorm_forward.1} parent=1 // pred_fallthru
      _
    // Predicated region
    $region14: #{batchnorm_forward.1} parent=1 // pred_check
      _
    $region15: #{batchnorm_forward.1} parent=1 // pred_check_branch
      %21 = sbr.rel (0) target = $region17
    $region16: #{batchnorm_forward.1} parent=1 // pred_region
      _
    $region17: #{batchnorm_forward.1} parent=1 // pred_fallthru
      _
    // Predicated region
    $region18: #{batchnorm_forward.1} parent=1 // pred_check
      _
    $region19: #{batchnorm_forward.1} parent=1 // pred_check_branch
      %23 = sbr.rel (0) target = $region21
    $region20: #{batchnorm_forward.1} parent=1 // pred_region
      _
    $region21: #{batchnorm_forward.1} parent=1 // pred_fallthru
      _
    %v24 = vld [vmem:[%s0] sm:$0xff]
    %vm25 = vcmask 261120
    %v26 = vsel %vm25, %v24, 0.0
    %v27 = vrot.slane %v26, 4
    %v28 = vadd.f32 %v26, %v27
    %v29 = vrot.slane %v28, 2
    %v30 = vadd.f32 %v28, %v29
    %v31 = vrot.slane %v30, 1
    %v32 = vadd.f32 %v30, %v31
    %v33 = vrcp.pop 8.0
    %v34 = vmul.f32 %v32, %v33
    %v35 = vsub.f32 %v24, %v34
    %v36 = vmul.f32 %v35, %v35
    %v37 = vsel %vm25, %v36, 0.0
    %v38 = vrot.slane %v37, 4
    %v39 = vadd.f32 %v37, %v38
    %v40 = vrot.slane %v39, 2
    %v41 = vadd.f32 %v39, %v40
    %v42 = vrot.slane %v41, 1
    %v43 = vadd.f32 %v41, %v42
    %v44 = vmul.f32 %v43, 0.14285715
    %v45 = vadd.f32 %v44, 1e-05
    %v46 = vrsqrt.pop %v45
    %v47 = vld [vmem:[%s1] sm:$0x1]
    %v48 = vmul.f32 %v46, %v47
    %v49 = vlaneseq
    %v50 = vshrl.u32 %v49, 7
    %v51 = vsub.s32 0, %v50
    %v52 = vrot.slane %v48, %v51
    %v53 = vmul.f32 %v35, %v52
    %v54 = vld [vmem:[%s2] sm:$0x1]
    %v56 = vlaneseq
    %v57 = vshrl.u32 %v56, 7
    %v58 = vsub.s32 0, %v57
    %v59 = vrot.slane %v54, %v58
    %v61 = vadd.f32 %v53, %v59
    %62 = vst.msk [vmem:[#allocation2] sm:$0xff] %vm25, %v61
    %v63 = vld [vmem:[%s3] sm:$0x1]
    %v64 = vmul.f32 %v63, 0.1
    %v65 = vmul.f32 %v34, 0.9
    %v66 = vadd.f32 %v64, %v65
    %vm67 = vcmask 253952
    %68 = vst.msk [vmem:[%s6] sm:$0x1] %vm67, %v66
    %v69 = vld [vmem:[%s4] sm:$0x1]
    %v70 = vmul.f32 %v69, 0.1
    %v71 = vmul.f32 %v44, 0.9
    %v72 = vadd.f32 %v70, %v71
    %73 = vst.msk [vmem:[%s7] sm:$0x1] %vm67, %v72
    // Predicated region
    $region22: #{batchnorm_forward.1} parent=1 // pred_check
      _
    $region23: #{batchnorm_forward.1} parent=1 // pred_check_branch
      %75 = sbr.rel (0) target = $region25
    $region24: #{batchnorm_forward.1} parent=1 // pred_region
      %s77 = ssub.s32 128, 128
      %78 = vsyncadd [#allocation3], %s77
      %s80 = sshll.u32 [#allocation2], 4
      %s81 = int_to_ptr.vmem [resolvable:$true] %s80
      %83 = dma.vmem_to_hbm [thread:$0]  %s81, 128, %s5, [#allocation3]
    $region25: #{batchnorm_forward.1} parent=1 // pred_fallthru
      _
    // Predicated region
    $region26: #{batchnorm_forward.1} parent=1 // pred_check
      _
    $region27: #{batchnorm_forward.1} parent=1 // pred_check_branch
      %85 = sbr.rel (0) target = $region29
    $region28: #{batchnorm_forward.1} parent=1 // pred_region
      _
    $region29: #{batchnorm_forward.1} parent=1 // pred_fallthru
      _
    // Predicated region
    $region30: #{batchnorm_forward.1} parent=1 // pred_check
      _
    $region31: #{batchnorm_forward.1} parent=1 // pred_check_branch
      %87 = sbr.rel (0) target = $region33
    $region32: #{batchnorm_forward.1} parent=1 // pred_region
      _
    $region33: #{batchnorm_forward.1} parent=1 // pred_fallthru
      _
    // Predicated region
    $region34: #{batchnorm_forward.1} parent=1 // pred_check
      _
    $region35: #{batchnorm_forward.1} parent=1 // pred_check_branch
      %89 = sbr.rel (0) target = $region37
    $region36: #{batchnorm_forward.1} parent=1 // pred_region
      %90 = dma.done [#allocation3], 128
    $region37: #{batchnorm_forward.1} parent=1 // pred_fallthru
      _
    // Predicated region
    $region38: #{batchnorm_forward.1} parent=1 // pred_check
      _
    $region39: #{batchnorm_forward.1} parent=1 // pred_check_branch
      %92 = sbr.rel (0) target = $region41
    $region40: #{batchnorm_forward.1} parent=1 // pred_region
      _
    $region41: #{batchnorm_forward.1} parent=1 // pred_fallthru
      _
    // Predicated region
    $region42: #{batchnorm_forward.1} parent=1 // pred_check
      _
    $region43: #{batchnorm_forward.1} parent=1 // pred_check_branch
      %94 = sbr.rel (0) target = $region45
    $region44: #{batchnorm_forward.1} parent=1 // pred_region
      _
    $region45: #{batchnorm_forward.1} parent=1 // pred_fallthru
      _
    %95 = vsyncpa [#allocation3], 1

</llo_original>
